<compile_context>
chip_gen: v7x
topology: tpu7x:2x2x1
jax: 0.10.0
libtpu: 0.0.40
codegen_flags: <defaults>
</compile_context>

<pallas_src>
import functools

import jax
import jax.numpy as jnp
from jax.experimental import pallas as pl
from jax.experimental.pallas import tpu as pltpu


def _round_up(x, m):
    return ((x + m - 1) // m) * m


# ----------------------------------------------------------------------------
# Fused MLP kernel: all layers chained in one kernel body, intermediates in
# vregs, single store of the final activation.
# Ref order: x_ref, w_0, b_0, w_1, b_1, ..., w_{L-1}, b_{L-1}, o_ref
# ----------------------------------------------------------------------------
def _mlp_kernel(*refs, n_layers):
    x_ref = refs[0]
    o_ref = refs[-1]
    wb_refs = refs[1:-1]

    h = x_ref[...]                                    # (TB, D0) bf16
    for i in range(n_layers):
        w = wb_refs[2 * i][...]                       # (Di, Di+1) bf16
        b = wb_refs[2 * i + 1][...]                   # (1,  Di+1) f32
        acc = jnp.dot(h, w, preferred_element_type=jnp.float32) + b
        if i < n_layers - 1:                          # ReLU on hidden layers
            h = jnp.maximum(acc, 0.0).astype(jnp.bfloat16)
        else:
            h = acc                                   # last layer: no activation
    o_ref[...] = h.astype(o_ref.dtype)


# ----------------------------------------------------------------------------
# Spec / tiling helpers
# ----------------------------------------------------------------------------
def _resident_spec(shape, single_buffer):
    """BlockSpec for a weight/bias that stays resident across all grid steps."""
    index_map = lambda *_: (0,) * len(shape)
    if single_buffer:
        # Constant index_map -> the block never changes; single-buffering
        # halves its VMEM footprint (important on v7x: 64 MiB/TC and weights
        # duplicated on both TCs when the batch axis is "parallel").
        return pl.BlockSpec(shape, index_map, pipeline_mode=pl.Buffered(1))
    return pl.BlockSpec(shape, index_map)


def _pick_batch_tile(B8, cap=1024):
    """Pick a batch tile (multiple of 8) that divides B8 exactly.

    Large tiles amortize the ~0.35 us/grid-step pipeline overhead; keeping
    >=2 grid steps (when the batch allows) lets the 'parallel' batch axis be
    sharded across the two TensorCores on v7x (neutral on v5e/v6e).
    """
    if B8 <= 8:
        return B8
    half = (B8 // 2) // 8 * 8
    tb = max(8, min(cap, half))
    while B8 % tb != 0:
        tb -= 8
    return tb


def _vmem_limit_bytes(TB, dims, prepped, single_buffer_weights):
    """Compute a VMEM budget from the actual buffer footprint."""
    # Pipelined (double-buffered) batch tiles: x bf16 in, y f32 out.
    io = 2 * TB * dims[0] * 2 + 2 * TB * dims[-1] * 4
    wfactor = 1 if single_buffer_weights else 2
    wb = sum(w.size * 2 + b.size * 4 for w, b in prepped) * wfactor
    # Largest intermediate activation (f32 accumulator + bf16 copy) in case it
    # spills from vregs to VMEM.
    inter = TB * max(dims) * (4 + 2)
    need = io + wb + inter + (4 << 20)          # + headroom for compiler scratch
    try:
        phys = pltpu.get_tpu_info().vmem_capacity_bytes
    except Exception:
        phys = 64 * 1024 * 1024                 # conservative: v7x per-TC VMEM
    return int(min(max(need, 32 * 1024 * 1024), phys - 8 * 1024 * 1024))


# ----------------------------------------------------------------------------
# Forward pass
# ----------------------------------------------------------------------------
@functools.partial(jax.jit, static_argnames=("single_buffer_weights",))
def _forward(x, prepped, single_buffer_weights=True):
    B, D0 = x.shape
    n_layers = len(prepped)
    dims = [D0] + [w.shape[1] for (w, _) in prepped]
    DL = dims[-1]

    # Batch: pad only to a sublane multiple (8); feature dims untouched.
    B8 = _round_up(max(B, 8), 8)
    TB = _pick_batch_tile(B8)

    x_bf = x.astype(jnp.bfloat16)
    if B8 != B:
        x_bf = jnp.pad(x_bf, ((0, B8 - B), (0, 0)))

    flat_inputs = [x_bf]
    in_specs = [pl.BlockSpec((TB, D0), lambda i: (i, 0))]
    for (w, b) in prepped:
        flat_inputs += [w, b]
        in_specs += [_resident_spec(w.shape, single_buffer_weights),
                     _resident_spec(b.shape, single_buffer_weights)]

    kernel = functools.partial(_mlp_kernel, n_layers=n_layers)
    # TODO(synk): for weight stacks that no longer fit per-TC VMEM (esp. v7x's
    # 64 MiB with weights duplicated on both cores), tile over layers / K with
    # pltpu.emit_pipeline from HBM instead of keeping every layer resident.
    y = pl.pallas_call(
        kernel,
        out_shape=jax.ShapeDtypeStruct((B8, DL), jnp.float32),
        grid=(B8 // TB,),
        in_specs=in_specs,
        out_specs=pl.BlockSpec((TB, DL), lambda i: (i, 0)),
        compiler_params=pltpu.CompilerParams(
            dimension_semantics=("parallel",),
            vmem_limit_bytes=_vmem_limit_bytes(TB, dims, prepped,
                                               single_buffer_weights),
        ),
    )(*flat_inputs)

    return y[:B]


def fully_connected_forward(x, prepped):
    """Fused forward of the FullyConnected MLP in a single Pallas kernel.

    x:       (B, D0) float32
    prepped: output of prepare_params() — ((w_bf16 (Di,Di+1), b_f32 (1,Di+1)), ...)
    """
    try:
        return _forward(x, prepped, single_buffer_weights=True)
    except Exception:
        # pipeline_mode=pl.Buffered(1) not supported by this JAX/Mosaic build;
        # fall back to the default (double-buffered) resident weight specs.
        return _forward(x, prepped, single_buffer_weights=False)


# ----------------------------------------------------------------------------
# One-time parameter preparation (hoisted out of the per-call path):
# weights -> bf16 (MXU feed), biases -> (1, Do) f32 (added to f32 accumulator).
# ----------------------------------------------------------------------------
def prepare_params(params):
    prepped = []
    for (w, b) in params:
        prepped.append((w.astype(jnp.bfloat16),
                        b.reshape(1, -1).astype(jnp.float32)))
    return tuple(prepped)


# ----------------------------------------------------------------------------
# Parameter init: deterministic orthogonal init (like nn.init.orthogonal_),
# last layer scaled by 1e-3, biases zero.
# ----------------------------------------------------------------------------
def orthogonal_init(key, out_features, in_features, scale=1.0):
    rows, cols = out_features, in_features
    flat = jax.random.normal(key, (max(rows, cols), min(rows, cols)),
                             dtype=jnp.float32)
    q, r = jnp.linalg.qr(flat)
    d = jnp.sign(jnp.diag(r))          # sign correction, as PyTorch does
    q = q * d[None, :]
    if rows < cols:
        q = q.T                        # (rows, cols) == (out, in)
    w_torch = q[:rows, :cols] * scale  # (out, in)
    return w_torch.T                   # (in, out) for x @ W


def build_params(key, hidden_layers_size):
    params = []
    n_layers = len(hidden_layers_size) - 1
    keys = jax.random.split(key, n_layers)
    for i in range(n_layers):
        in_f, out_f = hidden_layers_size[i], hidden_layers_size[i + 1]
        scale = 0.001 if i == n_layers - 1 else 1.0
        w = orthogonal_init(keys[i], out_f, in_f, scale=scale)
        b = jnp.zeros((out_f,), dtype=jnp.float32)
        params.append((w, b))
    return params


# Pure-JAX reference with identical numerics (bf16 MXU feed, f32 accumulate).
def fully_connected_ref(x, prepped):
    n_layers = len(prepped)
    h = x.astype(jnp.bfloat16)
    for i, (w, b) in enumerate(prepped):
        acc = jnp.dot(h, w, preferred_element_type=jnp.float32) + b
        if i < n_layers - 1:
            h = jnp.maximum(acc, 0.0).astype(jnp.bfloat16)
        else:
            h = acc
    return h


if __name__ == "__main__":
    key = jax.random.PRNGKey(0)
    k_x, k_p = jax.random.split(key)

    # Small, module-consistent shapes: batch=8, hidden sizes [32, 64, 64, 8]
    hidden_layers_size = [32, 64, 64, 8]
    batch = 8

    x = jax.random.normal(k_x, (batch, hidden_layers_size[0]),
                          dtype=jnp.float32)
    params = build_params(k_p, hidden_layers_size)
    prepped = prepare_params(params)          # one-time weight prep (bf16 cast)

    out = fully_connected_forward(x, prepped)
    out = jax.block_until_ready(out)

    ref = fully_connected_ref(x, prepped)
    assert out.shape == (batch, hidden_layers_size[-1])
    assert jnp.allclose(out, ref, atol=1e-4, rtol=1e-3), "mismatch vs reference"

    print("KERNEL_OK")
</pallas_src>

<mosaic_0001>
module attributes {stable_mosaic.version = 11 : i64} {
  func.func @_mlp_kernel(%arg0: i32, %arg1: memref<8x32xbf16, #tpu.memory_space<vmem>>, %arg2: memref<32x64xbf16, #tpu.memory_space<vmem>>, %arg3: memref<1x64xf32, #tpu.memory_space<vmem>>, %arg4: memref<64x64xbf16, #tpu.memory_space<vmem>>, %arg5: memref<1x64xf32, #tpu.memory_space<vmem>>, %arg6: memref<64x8xbf16, #tpu.memory_space<vmem>>, %arg7: memref<1x8xf32, #tpu.memory_space<vmem>>, %arg8: memref<8x8xf32, #tpu.memory_space<vmem>>) attributes {dimension_semantics = [#tpu.dimension_semantics<parallel>], iteration_bounds = array<i64: 1>, scalar_prefetch = 0 : i64, scratch_operands = 0 : i64, tpu.core_type = #tpu.core_type<tc>, window_params = [{transform_indices = @transform_0, window_bounds = array<i64: 8, 32>}, {pipeline_mode = #tpu.pipeline_mode<synchronous>, transform_indices = @transform_1, window_bounds = array<i64: 32, 64>}, {pipeline_mode = #tpu.pipeline_mode<synchronous>, transform_indices = @transform_2, window_bounds = array<i64: 1, 64>}, {pipeline_mode = #tpu.pipeline_mode<synchronous>, transform_indices = @transform_3, window_bounds = array<i64: 64, 64>}, {pipeline_mode = #tpu.pipeline_mode<synchronous>, transform_indices = @transform_4, window_bounds = array<i64: 1, 64>}, {pipeline_mode = #tpu.pipeline_mode<synchronous>, transform_indices = @transform_5, window_bounds = array<i64: 64, 8>}, {pipeline_mode = #tpu.pipeline_mode<synchronous>, transform_indices = @transform_6, window_bounds = array<i64: 1, 8>}, {transform_indices = @transform_7, window_bounds = array<i64: 8, 8>}]} {
    %c0 = arith.constant 0 : index
    %c0_0 = arith.constant 0 : index
    %0 = vector.load %arg1[%c0, %c0_0] : memref<8x32xbf16, #tpu.memory_space<vmem>>, vector<8x32xbf16>
    %c0_1 = arith.constant 0 : index
    %c0_2 = arith.constant 0 : index
    %1 = vector.load %arg2[%c0_1, %c0_2] : memref<32x64xbf16, #tpu.memory_space<vmem>>, vector<32x64xbf16>
    %c0_3 = arith.constant 0 : index
    %c0_4 = arith.constant 0 : index
    %2 = vector.load %arg3[%c0_3, %c0_4] : memref<1x64xf32, #tpu.memory_space<vmem>>, vector<1x64xf32>
    %cst = arith.constant dense<0.000000e+00> : vector<8x64xf32>
    %3 = tpu.matmul %0, %1, %cst {dimension_numbers = #tpu.dot_dimension_numbers<[1], [0], [0], [1], [0, 0, 1, 1], [], []>} : vector<8x32xbf16>, vector<32x64xbf16>, vector<8x64xf32> -> vector<8x64xf32>
    %4 = vector.broadcast %2 : vector<1x64xf32> to vector<8x64xf32>
    %5 = arith.addf %3, %4 : vector<8x64xf32>
    %cst_5 = arith.constant 0.000000e+00 : f32
    %6 = vector.broadcast %cst_5 : f32 to vector<8x64xf32>
    %7 = arith.maximumf %5, %6 : vector<8x64xf32>
    %8 = arith.truncf %7 : vector<8x64xf32> to vector<8x64xbf16>
    %c0_6 = arith.constant 0 : index
    %c0_7 = arith.constant 0 : index
    %9 = vector.load %arg4[%c0_6, %c0_7] : memref<64x64xbf16, #tpu.memory_space<vmem>>, vector<64x64xbf16>
    %c0_8 = arith.constant 0 : index
    %c0_9 = arith.constant 0 : index
    %10 = vector.load %arg5[%c0_8, %c0_9] : memref<1x64xf32, #tpu.memory_space<vmem>>, vector<1x64xf32>
    %cst_10 = arith.constant dense<0.000000e+00> : vector<8x64xf32>
    %11 = tpu.matmul %8, %9, %cst_10 {dimension_numbers = #tpu.dot_dimension_numbers<[1], [0], [0], [1], [0, 0, 1, 1], [], []>} : vector<8x64xbf16>, vector<64x64xbf16>, vector<8x64xf32> -> vector<8x64xf32>
    %12 = vector.broadcast %10 : vector<1x64xf32> to vector<8x64xf32>
    %13 = arith.addf %11, %12 : vector<8x64xf32>
    %cst_11 = arith.constant 0.000000e+00 : f32
    %14 = vector.broadcast %cst_11 : f32 to vector<8x64xf32>
    %15 = arith.maximumf %13, %14 : vector<8x64xf32>
    %16 = arith.truncf %15 : vector<8x64xf32> to vector<8x64xbf16>
    %c0_12 = arith.constant 0 : index
    %c0_13 = arith.constant 0 : index
    %17 = vector.load %arg6[%c0_12, %c0_13] : memref<64x8xbf16, #tpu.memory_space<vmem>>, vector<64x8xbf16>
    %c0_14 = arith.constant 0 : index
    %c0_15 = arith.constant 0 : index
    %18 = vector.load %arg7[%c0_14, %c0_15] : memref<1x8xf32, #tpu.memory_space<vmem>>, vector<1x8xf32>
    %cst_16 = arith.constant dense<0.000000e+00> : vector<8x8xf32>
    %19 = tpu.matmul %16, %17, %cst_16 {dimension_numbers = #tpu.dot_dimension_numbers<[1], [0], [0], [1], [0, 0, 1, 1], [], []>} : vector<8x64xbf16>, vector<64x8xbf16>, vector<8x8xf32> -> vector<8x8xf32>
    %20 = vector.broadcast %18 : vector<1x8xf32> to vector<8x8xf32>
    %21 = arith.addf %19, %20 : vector<8x8xf32>
    %c0_17 = arith.constant 0 : index
    %c0_18 = arith.constant 0 : index
    %22 = vector.load %arg8[%c0_17, %c0_18] : memref<8x8xf32, #tpu.memory_space<vmem>>, vector<8x8xf32>
    tpu.vector_store %arg8[%c0_17, %c0_18], %21 {strides = array<i32>} : memref<8x8xf32, #tpu.memory_space<vmem>>, vector<8x8xf32>,
    return
  }
  func.func @transform_0(%arg0: i32) -> (i32, i32) {
    %c0_i32 = arith.constant 0 : i32
    %c0_i32_0 = arith.constant 0 : i32
    return %arg0, %c0_i32 : i32, i32
  }
  func.func @transform_1(%arg0: i32) -> (i32, i32) {
    %c0_i32 = arith.constant 0 : i32
    %c0_i32_0 = arith.constant 0 : i32
    %c0_i32_1 = arith.constant 0 : i32
    return %c0_i32, %c0_i32_0 : i32, i32
  }
  func.func @transform_2(%arg0: i32) -> (i32, i32) {
    %c0_i32 = arith.constant 0 : i32
    %c0_i32_0 = arith.constant 0 : i32
    %c0_i32_1 = arith.constant 0 : i32
    return %c0_i32, %c0_i32_0 : i32, i32
  }
  func.func @transform_3(%arg0: i32) -> (i32, i32) {
    %c0_i32 = arith.constant 0 : i32
    %c0_i32_0 = arith.constant 0 : i32
    %c0_i32_1 = arith.constant 0 : i32
    return %c0_i32, %c0_i32_0 : i32, i32
  }
  func.func @transform_4(%arg0: i32) -> (i32, i32) {
    %c0_i32 = arith.constant 0 : i32
    %c0_i32_0 = arith.constant 0 : i32
    %c0_i32_1 = arith.constant 0 : i32
    return %c0_i32, %c0_i32_0 : i32, i32
  }
  func.func @transform_5(%arg0: i32) -> (i32, i32) {
    %c0_i32 = arith.constant 0 : i32
    %c0_i32_0 = arith.constant 0 : i32
    %c0_i32_1 = arith.constant 0 : i32
    return %c0_i32, %c0_i32_0 : i32, i32
  }
  func.func @transform_6(%arg0: i32) -> (i32, i32) {
    %c0_i32 = arith.constant 0 : i32
    %c0_i32_0 = arith.constant 0 : i32
    %c0_i32_1 = arith.constant 0 : i32
    return %c0_i32, %c0_i32_0 : i32, i32
  }
  func.func @transform_7(%arg0: i32) -> (i32, i32) {
    %c0_i32 = arith.constant 0 : i32
    %c0_i32_0 = arith.constant 0 : i32
    return %arg0, %c0_i32 : i32, i32
  }
}

module attributes {stable_mosaic.version = 11 : i64} {
  func.func @_mlp_kernel(%arg0: i32, %arg1: memref<8x32xbf16, #tpu.memory_space<vmem>>, %arg2: memref<32x64xbf16, #tpu.memory_space<vmem>>, %arg3: memref<1x64xf32, #tpu.memory_space<vmem>>, %arg4: memref<64x64xbf16, #tpu.memory_space<vmem>>, %arg5: memref<1x64xf32, #tpu.memory_space<vmem>>, %arg6: memref<64x8xbf16, #tpu.memory_space<vmem>>, %arg7: memref<1x8xf32, #tpu.memory_space<vmem>>, %arg8: memref<8x8xf32, #tpu.memory_space<vmem>>) attributes {dimension_semantics = [#tpu.dimension_semantics<parallel>], iteration_bounds = array<i64: 1>, scalar_prefetch = 0 : i64, scratch_operands = 0 : i64, tpu.core_type = #tpu.core_type<tc>, window_params = [{transform_indices = @transform_0, window_bounds = array<i64: 8, 32>}, {pipeline_mode = #tpu.pipeline_mode<synchronous>, transform_indices = @transform_1, window_bounds = array<i64: 32, 64>}, {pipeline_mode = #tpu.pipeline_mode<synchronous>, transform_indices = @transform_2, window_bounds = array<i64: 1, 64>}, {pipeline_mode = #tpu.pipeline_mode<synchronous>, transform_indices = @transform_3, window_bounds = array<i64: 64, 64>}, {pipeline_mode = #tpu.pipeline_mode<synchronous>, transform_indices = @transform_4, window_bounds = array<i64: 1, 64>}, {pipeline_mode = #tpu.pipeline_mode<synchronous>, transform_indices = @transform_5, window_bounds = array<i64: 64, 8>}, {pipeline_mode = #tpu.pipeline_mode<synchronous>, transform_indices = @transform_6, window_bounds = array<i64: 1, 8>}, {transform_indices = @transform_7, window_bounds = array<i64: 8, 8>}]} {
    %c0 = arith.constant 0 : index
    %c0_0 = arith.constant 0 : index
    %0 = vector.load %arg1[%c0, %c0_0] : memref<8x32xbf16, #tpu.memory_space<vmem>>, vector<8x32xbf16>
    %c0_1 = arith.constant 0 : index
    %c0_2 = arith.constant 0 : index
    %1 = vector.load %arg2[%c0_1, %c0_2] : memref<32x64xbf16, #tpu.memory_space<vmem>>, vector<32x64xbf16>
    %c0_3 = arith.constant 0 : index
    %c0_4 = arith.constant 0 : index
    %2 = vector.load %arg3[%c0_3, %c0_4] : memref<1x64xf32, #tpu.memory_space<vmem>>, vector<1x64xf32>
    %cst = arith.constant dense<0.000000e+00> : vector<8x64xf32>
    %3 = tpu.matmul %0, %1, %cst {dimension_numbers = #tpu.dot_dimension_numbers<[1], [0], [0], [1], [0, 0, 1, 1], [], []>} : vector<8x32xbf16>, vector<32x64xbf16>, vector<8x64xf32> -> vector<8x64xf32>
    %4 = vector.broadcast %2 : vector<1x64xf32> to vector<8x64xf32>
    %5 = arith.addf %3, %4 : vector<8x64xf32>
    %cst_5 = arith.constant 0.000000e+00 : f32
    %6 = vector.broadcast %cst_5 : f32 to vector<8x64xf32>
    %7 = arith.maximumf %5, %6 : vector<8x64xf32>
    %8 = arith.truncf %7 : vector<8x64xf32> to vector<8x64xbf16>
    %c0_6 = arith.constant 0 : index
    %c0_7 = arith.constant 0 : index
    %9 = vector.load %arg4[%c0_6, %c0_7] : memref<64x64xbf16, #tpu.memory_space<vmem>>, vector<64x64xbf16>
    %c0_8 = arith.constant 0 : index
    %c0_9 = arith.constant 0 : index
    %10 = vector.load %arg5[%c0_8, %c0_9] : memref<1x64xf32, #tpu.memory_space<vmem>>, vector<1x64xf32>
    %cst_10 = arith.constant dense<0.000000e+00> : vector<8x64xf32>
    %11 = tpu.matmul %8, %9, %cst_10 {dimension_numbers = #tpu.dot_dimension_numbers<[1], [0], [0], [1], [0, 0, 1, 1], [], []>} : vector<8x64xbf16>, vector<64x64xbf16>, vector<8x64xf32> -> vector<8x64xf32>
    %12 = vector.broadcast %10 : vector<1x64xf32> to vector<8x64xf32>
    %13 = arith.addf %11, %12 : vector<8x64xf32>
    %cst_11 = arith.constant 0.000000e+00 : f32
    %14 = vector.broadcast %cst_11 : f32 to vector<8x64xf32>
    %15 = arith.maximumf %13, %14 : vector<8x64xf32>
    %16 = arith.truncf %15 : vector<8x64xf32> to vector<8x64xbf16>
    %c0_12 = arith.constant 0 : index
    %c0_13 = arith.constant 0 : index
    %17 = vector.load %arg6[%c0_12, %c0_13] : memref<64x8xbf16, #tpu.memory_space<vmem>>, vector<64x8xbf16>
    %c0_14 = arith.constant 0 : index
    %c0_15 = arith.constant 0 : index
    %18 = vector.load %arg7[%c0_14, %c0_15] : memref<1x8xf32, #tpu.memory_space<vmem>>, vector<1x8xf32>
    %cst_16 = arith.constant dense<0.000000e+00> : vector<8x8xf32>
    %19 = tpu.matmul %16, %17, %cst_16 {dimension_numbers = #tpu.dot_dimension_numbers<[1], [0], [0], [1], [0, 0, 1, 1], [], []>} : vector<8x64xbf16>, vector<64x8xbf16>, vector<8x8xf32> -> vector<8x8xf32>
    %20 = vector.broadcast %18 : vector<1x8xf32> to vector<8x8xf32>
    %21 = arith.addf %19, %20 : vector<8x8xf32>
    %c0_17 = arith.constant 0 : index
    %c0_18 = arith.constant 0 : index
    %22 = vector.load %arg8[%c0_17, %c0_18] : memref<8x8xf32, #tpu.memory_space<vmem>>, vector<8x8xf32>
    tpu.vector_store %arg8[%c0_17, %c0_18], %21 {strides = array<i32>} : memref<8x8xf32, #tpu.memory_space<vmem>>, vector<8x8xf32>,
    return
  }
  func.func @transform_0(%arg0: i32) -> (i32, i32) {
    %c0_i32 = arith.constant 0 : i32
    %c0_i32_0 = arith.constant 0 : i32
    return %arg0, %c0_i32 : i32, i32
  }
  func.func @transform_1(%arg0: i32) -> (i32, i32) {
    %c0_i32 = arith.constant 0 : i32
    %c0_i32_0 = arith.constant 0 : i32
    %c0_i32_1 = arith.constant 0 : i32
    return %c0_i32, %c0_i32_0 : i32, i32
  }
  func.func @transform_2(%arg0: i32) -> (i32, i32) {
    %c0_i32 = arith.constant 0 : i32
    %c0_i32_0 = arith.constant 0 : i32
    %c0_i32_1 = arith.constant 0 : i32
    return %c0_i32, %c0_i32_0 : i32, i32
  }
  func.func @transform_3(%arg0: i32) -> (i32, i32) {
    %c0_i32 = arith.constant 0 : i32
    %c0_i32_0 = arith.constant 0 : i32
    %c0_i32_1 = arith.constant 0 : i32
    return %c0_i32, %c0_i32_0 : i32, i32
  }
  func.func @transform_4(%arg0: i32) -> (i32, i32) {
    %c0_i32 = arith.constant 0 : i32
    %c0_i32_0 = arith.constant 0 : i32
    %c0_i32_1 = arith.constant 0 : i32
    return %c0_i32, %c0_i32_0 : i32, i32
  }
  func.func @transform_5(%arg0: i32) -> (i32, i32) {
    %c0_i32 = arith.constant 0 : i32
    %c0_i32_0 = arith.constant 0 : i32
    %c0_i32_1 = arith.constant 0 : i32
    return %c0_i32, %c0_i32_0 : i32, i32
  }
  func.func @transform_6(%arg0: i32) -> (i32, i32) {
    %c0_i32 = arith.constant 0 : i32
    %c0_i32_0 = arith.constant 0 : i32
    %c0_i32_1 = arith.constant 0 : i32
    return %c0_i32, %c0_i32_0 : i32, i32
  }
  func.func @transform_7(%arg0: i32) -> (i32, i32) {
    %c0_i32 = arith.constant 0 : i32
    %c0_i32_0 = arith.constant 0 : i32
    return %arg0, %c0_i32 : i32, i32
  }
}

</mosaic_0001>

<llo_original>
// kernel: _forward.1
$region0: #{_forward.1}
  #allocation0 [shape = 'u32[]', space=smem, size = 0x4, offset = 0x4, fixed_abs, tag = 'smem constant byte address 0x4 - core index']
  #allocation1 [shape = 'u32[144,128]{1,0:T(1,128)}', space=vmem, size = 0x12000, scoped, tag = 'internal scratch']
  %s0 = inlined_call_operand.vmem [shape: bf16[8,32], index: 0, kind: input, shape index: {}]
  %s1 = inlined_call_operand.vmem [shape: bf16[32,64], index: 1, kind: input, shape index: {}]
  %s2 = inlined_call_operand.vmem [shape: f32[1,64], index: 2, kind: input, shape index: {}]
  %s3 = inlined_call_operand.vmem [shape: bf16[64,64], index: 3, kind: input, shape index: {}]
  %s4 = inlined_call_operand.vmem [shape: f32[1,64], index: 4, kind: input, shape index: {}]
  %s5 = inlined_call_operand.vmem [shape: bf16[64,8], index: 5, kind: input, shape index: {}]
  %s6 = inlined_call_operand.vmem [shape: f32[1,8], index: 6, kind: input, shape index: {}]
  %s7 = inlined_call_operand.hbm [shape: f32[8,8], index: 7, kind: output, shape index: {}]
  %s8 = sld [smem:[#allocation0]]
  $region38: #{_forward.1} parent=0
    _
  %s10 = ssub.s32 1, %s8
  %s11 = scalar_select 0, %s10, %s8
  $region1: #{_forward.1} parent=0
    #allocation2 [shape = 'u8[4096]{0}', space=vmem, size = 0x1000, scoped, tag = 'output window, operand 0, single buffered']
    #allocation3 [shape = 's32[1]{0}', space=sflag, size = 0x4, scoped, tag = 'scoped memory for _forward.1']
    %12 = vsyncpa [#allocation3], 0
    // Predicated region
    $region2: #{_forward.1} parent=1 // pred_check
      _
    $region3: #{_forward.1} parent=1 // pred_check_branch
      %14 = sbr.rel (0) target = $region5
    $region4: #{_forward.1} parent=1 // pred_region
      _
    $region5: #{_forward.1} parent=1 // pred_fallthru
      _
    // Predicated region
    $region6: #{_forward.1} parent=1 // pred_check
      _
    $region7: #{_forward.1} parent=1 // pred_check_branch
      %16 = sbr.rel (0) target = $region9
    $region8: #{_forward.1} parent=1 // pred_region
      _
    $region9: #{_forward.1} parent=1 // pred_fallthru
      _
    // Predicated region
    $region10: #{_forward.1} parent=1 // pred_check
      _
    $region11: #{_forward.1} parent=1 // pred_check_branch
      %18 = sbr.rel (0) target = $region13
    $region12: #{_forward.1} parent=1 // pred_region
      _
    $region13: #{_forward.1} parent=1 // pred_fallthru
      _
    // Predicated region
    $region14: #{_forward.1} parent=1 // pred_check
      _
    $region15: #{_forward.1} parent=1 // pred_check_branch
      %20 = sbr.rel (0) target = $region17
    $region16: #{_forward.1} parent=1 // pred_region
      _
    $region17: #{_forward.1} parent=1 // pred_fallthru
      _
    // Predicated region
    $region18: #{_forward.1} parent=1 // pred_check
      _
    $region19: #{_forward.1} parent=1 // pred_check_branch
      %22 = sbr.rel (0) target = $region21
    $region20: #{_forward.1} parent=1 // pred_region
      _
    $region21: #{_forward.1} parent=1 // pred_fallthru
      _
    // Predicated region
    $region22: #{_forward.1} parent=1 // pred_check
      _
    $region23: #{_forward.1} parent=1 // pred_check_branch
      %24 = sbr.rel (0) target = $region25
    $region24: #{_forward.1} parent=1 // pred_region
      _
    $region25: #{_forward.1} parent=1 // pred_fallthru
      _
    // Predicated region
    $region26: #{_forward.1} parent=1 // pred_check
      _
    $region27: #{_forward.1} parent=1 // pred_check_branch
      %26 = sbr.rel (0) target = $region29
    $region28: #{_forward.1} parent=1 // pred_region
      _
    $region29: #{_forward.1} parent=1 // pred_fallthru
      _
    %v28 = vld [vmem:[%s0] sm:$0xf]
    %v29 = vld [vmem:[%s1] sm:$0xf]
    %v30 = vld [vmem:[%s1 + $0x4] sm:$0xf]
    %v31 = vld [vmem:[%s1 + $0x8] sm:$0xf]
    %v32 = vld [vmem:[%s1 + $0xc] sm:$0xf]
    %v33 = vld [vmem:[%s2] sm:$0x1]
    %v35 = vlaneseq
    %v36 = vshrl.u32 %v35, 7
    %v37 = vsub.s32 0, %v36
    %v38 = vrot.slane %v33, %v37
    %v44 = vunpack.c.l.b16 %v29
    %v45 = vunpack.c.l.b16 %v30
    %v46 = vunpack.c.l.b16 %v31
    %v47 = vunpack.c.l.b16 %v32
    %v48 = vpack.c.b16 %v45, %v44
    %v49 = vpack.c.b16 %v47, %v46
    %vm52 = vcmask 261120
    %v54 = vsel %vm52, %v28, 0
    %56 = vmatprep.subr.bf16.mxu0 0
    %57 = vmatpush1.bf16.msra.mxu0 %v48
    %58 = vmatprep.subr.bf16.mxu0 0
    %59 = vmatpush1.bf16.msra.mxu0 %v49
    %60 = vmatprep.subr.bf16.mxu0 0
    %61 = vmatpush1.bf16.msra.mxu0 0
    %62 = vmatprep.subr.bf16.mxu0 0
    %63 = vmatpush1.bf16.msra.mxu0 0
    %64 = vmatprep.subr.bf16.mxu0 0
    %65 = vmatpush1.bf16.msra.mxu0 0
    %66 = vmatprep.subr.bf16.mxu0 0
    %67 = vmatpush1.bf16.msra.mxu0 0
    %68 = vmatprep.subr.bf16.mxu0 0
    %69 = vmatpush1.bf16.msra.mxu0 0
    %70 = vmatprep.subr.bf16.mxu0 0
    %71 = vmatpush1.bf16.msra.mxu0 0
    %72 = vmatprep.subr.bf16.mxu0 0
    %73 = vmatpush1.bf16.msra.mxu0 0
    %74 = vmatprep.subr.bf16.mxu0 0
    %75 = vmatpush1.bf16.msra.mxu0 0
    %76 = vmatprep.subr.bf16.mxu0 0
    %77 = vmatpush1.bf16.msra.mxu0 0
    %78 = vmatprep.subr.bf16.mxu0 0
    %79 = vmatpush1.bf16.msra.mxu0 0
    %80 = vmatprep.subr.bf16.mxu0 0
    %81 = vmatpush1.bf16.msra.mxu0 0
    %82 = vmatprep.subr.bf16.mxu0 0
    %83 = vmatpush1.bf16.msra.mxu0 0
    %84 = vmatprep.subr.bf16.mxu0 0
    %85 = vmatpush1.bf16.msra.mxu0 0
    %86 = vmatprep.subr.bf16.mxu0 0
    %87 = vmatpush1.bf16.msra.mxu0 0
    %88 = vmatprep.mubr.bf16.mxu0 0
    %89 = vmatmul.mubr.bf16.gmra.mrb[0].mxu0 %v54
    %v90 = vpop.f32.mrb[0].mxu0
    %v91 = vadd.f32 %v38, %v90
    %v92 = vpop.f32.mrb[0].mxu0
    %v93 = vpop.f32.mrb[0].mxu0
    %v94 = vpop.f32.mrb[0].mxu0
    %95 = vdwg.mxu0
    %v96 = vmax.f32 %v91, 0.0
    %v97 = vpack.c.bf16 %v96, %v96
    %v98 = vld [vmem:[%s3] sm:$0xf]
    %v99 = vld [vmem:[%s3 + $0x4] sm:$0xf]
    %v100 = vld [vmem:[%s3 + $0x8] sm:$0xf]
    %v101 = vld [vmem:[%s3 + $0xc] sm:$0xf]
    %v102 = vld [vmem:[%s3 + $0x10] sm:$0xf]
    %v103 = vld [vmem:[%s3 + $0x14] sm:$0xf]
    %v104 = vld [vmem:[%s3 + $0x18] sm:$0xf]
    %v105 = vld [vmem:[%s3 + $0x1c] sm:$0xf]
    %v106 = vld [vmem:[%s4] sm:$0x1]
    %v108 = vlaneseq
    %v109 = vshrl.u32 %v108, 7
    %v110 = vsub.s32 0, %v109
    %v111 = vrot.slane %v106, %v110
    %v121 = vunpack.c.l.b16 %v98
    %v122 = vunpack.c.l.b16 %v99
    %v123 = vunpack.c.l.b16 %v100
    %v124 = vunpack.c.l.b16 %v101
    %v125 = vunpack.c.l.b16 %v102
    %v126 = vunpack.c.l.b16 %v103
    %v127 = vunpack.c.l.b16 %v104
    %v128 = vunpack.c.l.b16 %v105
    %v129 = vpack.c.b16 %v122, %v121
    %v130 = vpack.c.b16 %v124, %v123
    %v131 = vpack.c.b16 %v126, %v125
    %v132 = vpack.c.b16 %v128, %v127
    %vm137 = vcmask 523264
    %v139 = vsel %vm137, %v97, 0
    %141 = vmatprep.subr.bf16.mxu0 0
    %142 = vmatpush1.bf16.msra.mxu0 %v129
    %143 = vmatprep.subr.bf16.mxu0 0
    %144 = vmatpush1.bf16.msra.mxu0 %v130
    %145 = vmatprep.subr.bf16.mxu0 0
    %146 = vmatpush1.bf16.msra.mxu0 %v131
    %147 = vmatprep.subr.bf16.mxu0 0
    %148 = vmatpush1.bf16.msra.mxu0 %v132
    %149 = vmatprep.subr.bf16.mxu0 0
    %150 = vmatpush1.bf16.msra.mxu0 0
    %151 = vmatprep.subr.bf16.mxu0 0
    %152 = vmatpush1.bf16.msra.mxu0 0
    %153 = vmatprep.subr.bf16.mxu0 0
    %154 = vmatpush1.bf16.msra.mxu0 0
    %155 = vmatprep.subr.bf16.mxu0 0
    %156 = vmatpush1.bf16.msra.mxu0 0
    %157 = vmatprep.subr.bf16.mxu0 0
    %158 = vmatpush1.bf16.msra.mxu0 0
    %159 = vmatprep.subr.bf16.mxu0 0
    %160 = vmatpush1.bf16.msra.mxu0 0
    %161 = vmatprep.subr.bf16.mxu0 0
    %162 = vmatpush1.bf16.msra.mxu0 0
    %163 = vmatprep.subr.bf16.mxu0 0
    %164 = vmatpush1.bf16.msra.mxu0 0
    %165 = vmatprep.subr.bf16.mxu0 0
    %166 = vmatpush1.bf16.msra.mxu0 0
    %167 = vmatprep.subr.bf16.mxu0 0
    %168 = vmatpush1.bf16.msra.mxu0 0
    %169 = vmatprep.subr.bf16.mxu0 0
    %170 = vmatpush1.bf16.msra.mxu0 0
    %171 = vmatprep.subr.bf16.mxu0 0
    %172 = vmatpush1.bf16.msra.mxu0 0
    %173 = vmatprep.mubr.bf16.mxu0 0
    %174 = vmatmul.mubr.bf16.gmra.mrb[0].mxu0 %v139
    %v175 = vpop.f32.mrb[0].mxu0
    %v176 = vadd.f32 %v111, %v175
    %v177 = vpop.f32.mrb[0].mxu0
    %v178 = vpop.f32.mrb[0].mxu0
    %v179 = vpop.f32.mrb[0].mxu0
    %180 = vdwg.mxu0
    %v181 = vmax.f32 %v176, 0.0
    %v182 = vpack.c.bf16 %v181, %v181
    %v183 = vld [vmem:[%s5] sm:$0xf]
    %v184 = vld [vmem:[%s5 + $0x4] sm:$0xf]
    %v185 = vld [vmem:[%s5 + $0x8] sm:$0xf]
    %v186 = vld [vmem:[%s5 + $0xc] sm:$0xf]
    %v187 = vld [vmem:[%s5 + $0x10] sm:$0xf]
    %v188 = vld [vmem:[%s5 + $0x14] sm:$0xf]
    %v189 = vld [vmem:[%s5 + $0x18] sm:$0xf]
    %v190 = vld [vmem:[%s5 + $0x1c] sm:$0xf]
    %v191 = vld [vmem:[%s6] sm:$0x1]
    %v193 = vlaneseq
    %v194 = vshrl.u32 %v193, 7
    %v195 = vsub.s32 0, %v194
    %v196 = vrot.slane %v191, %v195
    %v206 = vunpack.c.l.b16 %v183
    %v207 = vunpack.c.l.b16 %v184
    %v208 = vunpack.c.l.b16 %v185
    %v209 = vunpack.c.l.b16 %v186
    %v210 = vunpack.c.l.b16 %v187
    %v211 = vunpack.c.l.b16 %v188
    %v212 = vunpack.c.l.b16 %v189
    %v213 = vunpack.c.l.b16 %v190
    %v214 = vpack.c.b16 %v207, %v206
    %v215 = vpack.c.b16 %v209, %v208
    %v216 = vpack.c.b16 %v211, %v210
    %v217 = vpack.c.b16 %v213, %v212
    %v223 = vsel %vm137, %v182, 0
    %225 = vmatprep.subr.bf16.mxu0 0
    %226 = vmatpush1.bf16.msra.mxu0 %v214
    %227 = vmatprep.subr.bf16.mxu0 0
    %228 = vmatpush1.bf16.msra.mxu0 %v215
    %229 = vmatprep.subr.bf16.mxu0 0
    %230 = vmatpush1.bf16.msra.mxu0 %v216
    %231 = vmatprep.subr.bf16.mxu0 0
    %232 = vmatpush1.bf16.msra.mxu0 %v217
    %233 = vmatprep.subr.bf16.mxu0 0
    %234 = vmatpush1.bf16.msra.mxu0 0
    %235 = vmatprep.subr.bf16.mxu0 0
    %236 = vmatpush1.bf16.msra.mxu0 0
    %237 = vmatprep.subr.bf16.mxu0 0
    %238 = vmatpush1.bf16.msra.mxu0 0
    %239 = vmatprep.subr.bf16.mxu0 0
    %240 = vmatpush1.bf16.msra.mxu0 0
    %241 = vmatprep.subr.bf16.mxu0 0
    %242 = vmatpush1.bf16.msra.mxu0 0
    %243 = vmatprep.subr.bf16.mxu0 0
    %244 = vmatpush1.bf16.msra.mxu0 0
    %245 = vmatprep.subr.bf16.mxu0 0
    %246 = vmatpush1.bf16.msra.mxu0 0
    %247 = vmatprep.subr.bf16.mxu0 0
    %248 = vmatpush1.bf16.msra.mxu0 0
    %249 = vmatprep.subr.bf16.mxu0 0
    %250 = vmatpush1.bf16.msra.mxu0 0
    %251 = vmatprep.subr.bf16.mxu0 0
    %252 = vmatpush1.bf16.msra.mxu0 0
    %253 = vmatprep.subr.bf16.mxu0 0
    %254 = vmatpush1.bf16.msra.mxu0 0
    %255 = vmatprep.subr.bf16.mxu0 0
    %256 = vmatpush1.bf16.msra.mxu0 0
    %257 = vmatprep.mubr.bf16.mxu0 0
    %258 = vmatmul.mubr.bf16.gmra.mrb[0].mxu0 %v223
    %v259 = vpop.f32.mrb[0].mxu0
    %v260 = vadd.f32 %v196, %v259
    %v261 = vpop.f32.mrb[0].mxu0
    %v262 = vpop.f32.mrb[0].mxu0
    %v263 = vpop.f32.mrb[0].mxu0
    %264 = vdwg.mxu0
    %vm265 = vcmask 64512
    %266 = vst.msk [vmem:[#allocation2] sm:$0xff] %vm265, %v260
    // Predicated region
    $region30: #{_forward.1} parent=1 // pred_check
      _
    $region31: #{_forward.1} parent=1 // pred_check_branch
      %268 = sbr.rel (0) target = $region33
    $region32: #{_forward.1} parent=1 // pred_region
      %s270 = ssub.s32 128, 128
      %271 = vsyncadd [#allocation3], %s270
      %s273 = sshll.u32 [#allocation2], 4
      %s274 = int_to_ptr.vmem [resolvable:$true] %s273
      %276 = dma.vmem_to_hbm [thread:$0]  %s274, 128, %s7, [#allocation3]
    $region33: #{_forward.1} parent=1 // pred_fallthru
      _
    // Predicated region
    $region34: #{_forward.1} parent=1 // pred_check
      _
    $region35: #{_forward.1} parent=1 // pred_check_branch
      %278 = sbr.rel (0) target = $region37
    $region36: #{_forward.1} parent=1 // pred_region
      %279 = dma.done [#allocation3], 128
    $region37: #{_forward.1} parent=1 // pred_fallthru
      _
    %280 = vsyncpa [#allocation3], 1

// kernel: _forward.1
$region0: #{_forward.1}
  #allocation0 [shape = 'u32[]', space=smem, size = 0x4, offset = 0x4, fixed_abs, tag = 'smem constant byte address 0x4 - core index']
  #allocation1 [shape = 'u32[144,128]{1,0:T(1,128)}', space=vmem, size = 0x12000, scoped, tag = 'internal scratch']
  %s0 = inlined_call_operand.vmem [shape: bf16[8,32], index: 0, kind: input, shape index: {}]
  %s1 = inlined_call_operand.vmem [shape: bf16[32,64], index: 1, kind: input, shape index: {}]
  %s2 = inlined_call_operand.vmem [shape: f32[1,64], index: 2, kind: input, shape index: {}]
  %s3 = inlined_call_operand.vmem [shape: bf16[64,64], index: 3, kind: input, shape index: {}]
  %s4 = inlined_call_operand.vmem [shape: f32[1,64], index: 4, kind: input, shape index: {}]
  %s5 = inlined_call_operand.vmem [shape: bf16[64,8], index: 5, kind: input, shape index: {}]
  %s6 = inlined_call_operand.vmem [shape: f32[1,8], index: 6, kind: input, shape index: {}]
  %s7 = inlined_call_operand.hbm [shape: f32[8,8], index: 7, kind: output, shape index: {}]
  %s8 = sld [smem:[#allocation0]]
  $region38: #{_forward.1} parent=0
    _
  %s10 = ssub.s32 1, %s8
  %s11 = scalar_select 0, %s10, %s8
  $region1: #{_forward.1} parent=0
    #allocation2 [shape = 'u8[4096]{0}', space=vmem, size = 0x1000, scoped, tag = 'output window, operand 0, single buffered']
    #allocation3 [shape = 's32[1]{0}', space=sflag, size = 0x4, scoped, tag = 'scoped memory for _forward.1']
    %12 = vsyncpa [#allocation3], 0
    // Predicated region
    $region2: #{_forward.1} parent=1 // pred_check
      _
    $region3: #{_forward.1} parent=1 // pred_check_branch
      %14 = sbr.rel (0) target = $region5
    $region4: #{_forward.1} parent=1 // pred_region
      _
    $region5: #{_forward.1} parent=1 // pred_fallthru
      _
    // Predicated region
    $region6: #{_forward.1} parent=1 // pred_check
      _
    $region7: #{_forward.1} parent=1 // pred_check_branch
      %16 = sbr.rel (0) target = $region9
    $region8: #{_forward.1} parent=1 // pred_region
      _
    $region9: #{_forward.1} parent=1 // pred_fallthru
      _
    // Predicated region
    $region10: #{_forward.1} parent=1 // pred_check
      _
    $region11: #{_forward.1} parent=1 // pred_check_branch
      %18 = sbr.rel (0) target = $region13
    $region12: #{_forward.1} parent=1 // pred_region
      _
    $region13: #{_forward.1} parent=1 // pred_fallthru
      _
    // Predicated region
    $region14: #{_forward.1} parent=1 // pred_check
      _
    $region15: #{_forward.1} parent=1 // pred_check_branch
      %20 = sbr.rel (0) target = $region17
    $region16: #{_forward.1} parent=1 // pred_region
      _
    $region17: #{_forward.1} parent=1 // pred_fallthru
      _
    // Predicated region
    $region18: #{_forward.1} parent=1 // pred_check
      _
    $region19: #{_forward.1} parent=1 // pred_check_branch
      %22 = sbr.rel (0) target = $region21
    $region20: #{_forward.1} parent=1 // pred_region
      _
    $region21: #{_forward.1} parent=1 // pred_fallthru
      _
    // Predicated region
    $region22: #{_forward.1} parent=1 // pred_check
      _
    $region23: #{_forward.1} parent=1 // pred_check_branch
      %24 = sbr.rel (0) target = $region25
    $region24: #{_forward.1} parent=1 // pred_region
      _
    $region25: #{_forward.1} parent=1 // pred_fallthru
      _
    // Predicated region
    $region26: #{_forward.1} parent=1 // pred_check
      _
    $region27: #{_forward.1} parent=1 // pred_check_branch
      %26 = sbr.rel (0) target = $region29
    $region28: #{_forward.1} parent=1 // pred_region
      _
    $region29: #{_forward.1} parent=1 // pred_fallthru
      _
    %v28 = vld [vmem:[%s0] sm:$0xf]
    %v29 = vld [vmem:[%s1] sm:$0xf]
    %v30 = vld [vmem:[%s1 + $0x4] sm:$0xf]
    %v31 = vld [vmem:[%s1 + $0x8] sm:$0xf]
    %v32 = vld [vmem:[%s1 + $0xc] sm:$0xf]
    %v33 = vld [vmem:[%s2] sm:$0x1]
    %v35 = vlaneseq
    %v36 = vshrl.u32 %v35, 7
    %v37 = vsub.s32 0, %v36
    %v38 = vrot.slane %v33, %v37
    %v44 = vunpack.c.l.b16 %v29
    %v45 = vunpack.c.l.b16 %v30
    %v46 = vunpack.c.l.b16 %v31
    %v47 = vunpack.c.l.b16 %v32
    %v48 = vpack.c.b16 %v45, %v44
    %v49 = vpack.c.b16 %v47, %v46
    %vm52 = vcmask 261120
    %v54 = vsel %vm52, %v28, 0
    %56 = vmatprep.subr.bf16.mxu0 0
    %57 = vmatpush1.bf16.msra.mxu0 %v48
    %58 = vmatprep.subr.bf16.mxu0 0
    %59 = vmatpush1.bf16.msra.mxu0 %v49
    %60 = vmatprep.subr.bf16.mxu0 0
    %61 = vmatpush1.bf16.msra.mxu0 0
    %62 = vmatprep.subr.bf16.mxu0 0
    %63 = vmatpush1.bf16.msra.mxu0 0
    %64 = vmatprep.subr.bf16.mxu0 0
    %65 = vmatpush1.bf16.msra.mxu0 0
    %66 = vmatprep.subr.bf16.mxu0 0
    %67 = vmatpush1.bf16.msra.mxu0 0
    %68 = vmatprep.subr.bf16.mxu0 0
    %69 = vmatpush1.bf16.msra.mxu0 0
    %70 = vmatprep.subr.bf16.mxu0 0
    %71 = vmatpush1.bf16.msra.mxu0 0
    %72 = vmatprep.subr.bf16.mxu0 0
    %73 = vmatpush1.bf16.msra.mxu0 0
    %74 = vmatprep.subr.bf16.mxu0 0
    %75 = vmatpush1.bf16.msra.mxu0 0
    %76 = vmatprep.subr.bf16.mxu0 0
    %77 = vmatpush1.bf16.msra.mxu0 0
    %78 = vmatprep.subr.bf16.mxu0 0
    %79 = vmatpush1.bf16.msra.mxu0 0
    %80 = vmatprep.subr.bf16.mxu0 0
    %81 = vmatpush1.bf16.msra.mxu0 0
    %82 = vmatprep.subr.bf16.mxu0 0
    %83 = vmatpush1.bf16.msra.mxu0 0
    %84 = vmatprep.subr.bf16.mxu0 0
    %85 = vmatpush1.bf16.msra.mxu0 0
    %86 = vmatprep.subr.bf16.mxu0 0
    %87 = vmatpush1.bf16.msra.mxu0 0
    %88 = vmatprep.mubr.bf16.mxu0 0
    %89 = vmatmul.mubr.bf16.gmra.mrb[0].mxu0 %v54
    %v90 = vpop.f32.mrb[0].mxu0
    %v91 = vadd.f32 %v38, %v90
    %v92 = vpop.f32.mrb[0].mxu0
    %v93 = vpop.f32.mrb[0].mxu0
    %v94 = vpop.f32.mrb[0].mxu0
    %95 = vdwg.mxu0
    %v96 = vmax.f32 %v91, 0.0
    %v97 = vpack.c.bf16 %v96, %v96
    %v98 = vld [vmem:[%s3] sm:$0xf]
    %v99 = vld [vmem:[%s3 + $0x4] sm:$0xf]
    %v100 = vld [vmem:[%s3 + $0x8] sm:$0xf]
    %v101 = vld [vmem:[%s3 + $0xc] sm:$0xf]
    %v102 = vld [vmem:[%s3 + $0x10] sm:$0xf]
    %v103 = vld [vmem:[%s3 + $0x14] sm:$0xf]
    %v104 = vld [vmem:[%s3 + $0x18] sm:$0xf]
    %v105 = vld [vmem:[%s3 + $0x1c] sm:$0xf]
    %v106 = vld [vmem:[%s4] sm:$0x1]
    %v108 = vlaneseq
    %v109 = vshrl.u32 %v108, 7
    %v110 = vsub.s32 0, %v109
    %v111 = vrot.slane %v106, %v110
    %v121 = vunpack.c.l.b16 %v98
    %v122 = vunpack.c.l.b16 %v99
    %v123 = vunpack.c.l.b16 %v100
    %v124 = vunpack.c.l.b16 %v101
    %v125 = vunpack.c.l.b16 %v102
    %v126 = vunpack.c.l.b16 %v103
    %v127 = vunpack.c.l.b16 %v104
    %v128 = vunpack.c.l.b16 %v105
    %v129 = vpack.c.b16 %v122, %v121
    %v130 = vpack.c.b16 %v124, %v123
    %v131 = vpack.c.b16 %v126, %v125
    %v132 = vpack.c.b16 %v128, %v127
    %vm137 = vcmask 523264
    %v139 = vsel %vm137, %v97, 0
    %141 = vmatprep.subr.bf16.mxu0 0
    %142 = vmatpush1.bf16.msra.mxu0 %v129
    %143 = vmatprep.subr.bf16.mxu0 0
    %144 = vmatpush1.bf16.msra.mxu0 %v130
    %145 = vmatprep.subr.bf16.mxu0 0
    %146 = vmatpush1.bf16.msra.mxu0 %v131
    %147 = vmatprep.subr.bf16.mxu0 0
    %148 = vmatpush1.bf16.msra.mxu0 %v132
    %149 = vmatprep.subr.bf16.mxu0 0
    %150 = vmatpush1.bf16.msra.mxu0 0
    %151 = vmatprep.subr.bf16.mxu0 0
    %152 = vmatpush1.bf16.msra.mxu0 0
    %153 = vmatprep.subr.bf16.mxu0 0
    %154 = vmatpush1.bf16.msra.mxu0 0
    %155 = vmatprep.subr.bf16.mxu0 0
    %156 = vmatpush1.bf16.msra.mxu0 0
    %157 = vmatprep.subr.bf16.mxu0 0
    %158 = vmatpush1.bf16.msra.mxu0 0
    %159 = vmatprep.subr.bf16.mxu0 0
    %160 = vmatpush1.bf16.msra.mxu0 0
    %161 = vmatprep.subr.bf16.mxu0 0
    %162 = vmatpush1.bf16.msra.mxu0 0
    %163 = vmatprep.subr.bf16.mxu0 0
    %164 = vmatpush1.bf16.msra.mxu0 0
    %165 = vmatprep.subr.bf16.mxu0 0
    %166 = vmatpush1.bf16.msra.mxu0 0
    %167 = vmatprep.subr.bf16.mxu0 0
    %168 = vmatpush1.bf16.msra.mxu0 0
    %169 = vmatprep.subr.bf16.mxu0 0
    %170 = vmatpush1.bf16.msra.mxu0 0
    %171 = vmatprep.subr.bf16.mxu0 0
    %172 = vmatpush1.bf16.msra.mxu0 0
    %173 = vmatprep.mubr.bf16.mxu0 0
    %174 = vmatmul.mubr.bf16.gmra.mrb[0].mxu0 %v139
    %v175 = vpop.f32.mrb[0].mxu0
    %v176 = vadd.f32 %v111, %v175
    %v177 = vpop.f32.mrb[0].mxu0
    %v178 = vpop.f32.mrb[0].mxu0
    %v179 = vpop.f32.mrb[0].mxu0
    %180 = vdwg.mxu0
    %v181 = vmax.f32 %v176, 0.0
    %v182 = vpack.c.bf16 %v181, %v181
    %v183 = vld [vmem:[%s5] sm:$0xf]
    %v184 = vld [vmem:[%s5 + $0x4] sm:$0xf]
    %v185 = vld [vmem:[%s5 + $0x8] sm:$0xf]
    %v186 = vld [vmem:[%s5 + $0xc] sm:$0xf]
    %v187 = vld [vmem:[%s5 + $0x10] sm:$0xf]
    %v188 = vld [vmem:[%s5 + $0x14] sm:$0xf]
    %v189 = vld [vmem:[%s5 + $0x18] sm:$0xf]
    %v190 = vld [vmem:[%s5 + $0x1c] sm:$0xf]
    %v191 = vld [vmem:[%s6] sm:$0x1]
    %v193 = vlaneseq
    %v194 = vshrl.u32 %v193, 7
    %v195 = vsub.s32 0, %v194
    %v196 = vrot.slane %v191, %v195
    %v206 = vunpack.c.l.b16 %v183
    %v207 = vunpack.c.l.b16 %v184
    %v208 = vunpack.c.l.b16 %v185
    %v209 = vunpack.c.l.b16 %v186
    %v210 = vunpack.c.l.b16 %v187
    %v211 = vunpack.c.l.b16 %v188
    %v212 = vunpack.c.l.b16 %v189
    %v213 = vunpack.c.l.b16 %v190
    %v214 = vpack.c.b16 %v207, %v206
    %v215 = vpack.c.b16 %v209, %v208
    %v216 = vpack.c.b16 %v211, %v210
    %v217 = vpack.c.b16 %v213, %v212
    %v223 = vsel %vm137, %v182, 0
    %225 = vmatprep.subr.bf16.mxu0 0
    %226 = vmatpush1.bf16.msra.mxu0 %v214
    %227 = vmatprep.subr.bf16.mxu0 0
    %228 = vmatpush1.bf16.msra.mxu0 %v215
    %229 = vmatprep.subr.bf16.mxu0 0
    %230 = vmatpush1.bf16.msra.mxu0 %v216
    %231 = vmatprep.subr.bf16.mxu0 0
    %232 = vmatpush1.bf16.msra.mxu0 %v217
    %233 = vmatprep.subr.bf16.mxu0 0
    %234 = vmatpush1.bf16.msra.mxu0 0
    %235 = vmatprep.subr.bf16.mxu0 0
    %236 = vmatpush1.bf16.msra.mxu0 0
    %237 = vmatprep.subr.bf16.mxu0 0
    %238 = vmatpush1.bf16.msra.mxu0 0
    %239 = vmatprep.subr.bf16.mxu0 0
    %240 = vmatpush1.bf16.msra.mxu0 0
    %241 = vmatprep.subr.bf16.mxu0 0
    %242 = vmatpush1.bf16.msra.mxu0 0
    %243 = vmatprep.subr.bf16.mxu0 0
    %244 = vmatpush1.bf16.msra.mxu0 0
    %245 = vmatprep.subr.bf16.mxu0 0
    %246 = vmatpush1.bf16.msra.mxu0 0
    %247 = vmatprep.subr.bf16.mxu0 0
    %248 = vmatpush1.bf16.msra.mxu0 0
    %249 = vmatprep.subr.bf16.mxu0 0
    %250 = vmatpush1.bf16.msra.mxu0 0
    %251 = vmatprep.subr.bf16.mxu0 0
    %252 = vmatpush1.bf16.msra.mxu0 0
    %253 = vmatprep.subr.bf16.mxu0 0
    %254 = vmatpush1.bf16.msra.mxu0 0
    %255 = vmatprep.subr.bf16.mxu0 0
    %256 = vmatpush1.bf16.msra.mxu0 0
    %257 = vmatprep.mubr.bf16.mxu0 0
    %258 = vmatmul.mubr.bf16.gmra.mrb[0].mxu0 %v223
    %v259 = vpop.f32.mrb[0].mxu0
    %v260 = vadd.f32 %v196, %v259
    %v261 = vpop.f32.mrb[0].mxu0
    %v262 = vpop.f32.mrb[0].mxu0
    %v263 = vpop.f32.mrb[0].mxu0
    %264 = vdwg.mxu0
    %vm265 = vcmask 64512
    %266 = vst.msk [vmem:[#allocation2] sm:$0xff] %vm265, %v260
    // Predicated region
    $region30: #{_forward.1} parent=1 // pred_check
      _
    $region31: #{_forward.1} parent=1 // pred_check_branch
      %268 = sbr.rel (0) target = $region33
    $region32: #{_forward.1} parent=1 // pred_region
      %s270 = ssub.s32 128, 128
      %271 = vsyncadd [#allocation3], %s270
      %s273 = sshll.u32 [#allocation2], 4
      %s274 = int_to_ptr.vmem [resolvable:$true] %s273
      %276 = dma.vmem_to_hbm [thread:$0]  %s274, 128, %s7, [#allocation3]
    $region33: #{_forward.1} parent=1 // pred_fallthru
      _
    // Predicated region
    $region34: #{_forward.1} parent=1 // pred_check
      _
    $region35: #{_forward.1} parent=1 // pred_check_branch
      %278 = sbr.rel (0) target = $region37
    $region36: #{_forward.1} parent=1 // pred_region
      %279 = dma.done [#allocation3], 128
    $region37: #{_forward.1} parent=1 // pred_fallthru
      _
    %280 = vsyncpa [#allocation3], 1

</llo_original>
